<compile_context>
chip_gen: v5e
topology: v5e:2x2
jax: 0.10.0
libtpu: 0.0.40
codegen_flags: <defaults>
</compile_context>

<pallas_src>
import math

import jax
import jax.numpy as jnp
from jax.experimental import pallas as pl
from jax.experimental.pallas import tpu as pltpu

_HALF_LOG_2PI = 0.5 * math.log(2.0 * math.pi)


def _softplus(z):
    # numerically stable softplus = log(1 + exp(z))
    return jnp.maximum(z, 0.0) + jnp.log1p(jnp.exp(-jnp.abs(z)))


def policy_kernel(x_ref, w1_ref, b1_ref, wh_ref, bh_ref, eps_ref,
                  action_ref, logp_ref):
    A = action_ref.shape[-1]

    # fc1 + ReLU: x streamed in f32, cast to bf16 on-chip (VPU work hidden
    # under the input DMA); f32 accumulation on the MXU.
    x_bf = x_ref[...].astype(jnp.bfloat16)
    h = jnp.dot(x_bf, w1_ref[...],
                preferred_element_type=jnp.float32) + b1_ref[...]
    h = jnp.maximum(h, 0.0)

    # fused heads: one (H, 2A) GEMM instead of two tiny (H, A) GEMMs
    heads = jnp.dot(h.astype(wh_ref.dtype), wh_ref[...],
                    preferred_element_type=jnp.float32) + bh_ref[...]
    mu = heads[:, :A]
    std_pre = heads[:, A:]

    # std = clamp(softplus(fc_std(h)), min=1e-6)
    std = jnp.maximum(_softplus(std_pre), 1e-6)

    # TODO(synk): the torch.isnan(...) debug print has no in-kernel equivalent; omitted.

    # rsample: normal_sample = mu + std * eps,  eps ~ N(0, 1)
    eps = eps_ref[...]
    normal_sample = mu + std * eps

    # Normal(mu, std).log_prob(normal_sample), with (x - mu)/std == eps
    log_prob = -0.5 * eps * eps - jnp.log(std) - _HALF_LOG_2PI

    # action = tanh(normal_sample)
    action = jnp.tanh(normal_sample)

    # reproduce the original (double-tanh) correction exactly:
    # log_prob = log_prob - log(1 - tanh(action)^2 + 1e-7)
    t2 = jnp.tanh(action)
    log_prob = log_prob - jnp.log(1.0 - t2 * t2 + 1e-7)

    action_ref[...] = action
    # sum(dim=-1, keepdim=True) done in-kernel (XLU cross-lane reduce)
    logp_ref[...] = jnp.sum(log_prob, axis=-1, keepdims=True)


def _round_up(n, m):
    return ((n + m - 1) // m) * m


def prepare_params(params):
    """One-time head fusion + bf16 cast of the tiny weights (out of the hot path)."""
    wh = jnp.concatenate([params["w_mu"], params["w_std"]], axis=1)   # (H, 2A)
    bh = jnp.concatenate([params["b_mu"], params["b_std"]], axis=1)   # (1, 2A)
    return {
        "w1": params["w1"].astype(jnp.bfloat16),
        "b1": params["b1"].astype(jnp.float32),
        "wh": wh.astype(jnp.bfloat16),
        "bh": bh.astype(jnp.float32),
    }


def policy_forward(x, prepped, eps, *, tb=2048):
    B, S = x.shape
    A = prepped["wh"].shape[1] // 2

    # Batch tile: large enough to amortize per-step pipeline overhead, a
    # multiple of 16 (bf16 sublane packing), and capped so the grid has >= 2
    # steps whenever the batch allows (v7x megacore sharding of the
    # "parallel" axis).  Ragged batches are zero-padded and sliced back.
    TB = max(16, min(tb, _round_up(pl.cdiv(B, 2), 16)))
    Bp = _round_up(B, TB)
    if Bp != B:
        x = jnp.pad(x, ((0, Bp - B), (0, 0)))
        eps = jnp.pad(eps, ((0, Bp - B), (0, 0)))

    x = x.astype(jnp.float32)      # streamed f32; bf16 cast happens in-kernel
    eps = eps.astype(jnp.float32)

    grid = (Bp // TB,)
    resident = lambda a: pl.BlockSpec(a.shape, lambda i: (0,) * a.ndim)

    action, logp = pl.pallas_call(
        policy_kernel,
        out_shape=(
            jax.ShapeDtypeStruct((Bp, A), jnp.float32),
            jax.ShapeDtypeStruct((Bp, 1), jnp.float32),
        ),
        grid=grid,
        in_specs=[
            pl.BlockSpec((TB, S), lambda i: (i, 0)),        # x stream (pipelined)
            resident(prepped["w1"]), resident(prepped["b1"]),  # resident weights
            resident(prepped["wh"]), resident(prepped["bh"]),
            pl.BlockSpec((TB, A), lambda i: (i, 0)),        # eps stream
        ],
        out_specs=(
            pl.BlockSpec((TB, A), lambda i: (i, 0)),
            pl.BlockSpec((TB, 1), lambda i: (i, 0)),
        ),
        compiler_params=pltpu.CompilerParams(
            dimension_semantics=("parallel",),
            vmem_limit_bytes=32 * 1024 * 1024),
    )(x, prepped["w1"], prepped["b1"], prepped["wh"], prepped["bh"], eps)

    return action[:B], logp[:B]


def init_params(key, state_dim, hidden_dim, action_dim):
    # deterministic synthetic init (uniform, roughly matching nn.Linear scaling)
    ks = jax.random.split(key, 6)

    def lin(kw, kb, fan_in, fan_out):
        bound = 1.0 / math.sqrt(fan_in)
        w = jax.random.uniform(kw, (fan_in, fan_out), jnp.float32, -bound, bound)
        b = jax.random.uniform(kb, (1, fan_out), jnp.float32, -bound, bound)
        return w, b

    w1, b1 = lin(ks[0], ks[1], state_dim, hidden_dim)
    w_mu, b_mu = lin(ks[2], ks[3], hidden_dim, action_dim)
    w_std, b_std = lin(ks[4], ks[5], hidden_dim, action_dim)
    return {"w1": w1, "b1": b1, "w_mu": w_mu, "b_mu": b_mu,
            "w_std": w_std, "b_std": b_std}


def _reference_forward(x, prepped, eps):
    """Pure-JAX reference with the same bf16 operand casts (for validation)."""
    A = prepped["wh"].shape[1] // 2
    h = jnp.dot(x.astype(jnp.bfloat16), prepped["w1"],
                preferred_element_type=jnp.float32) + prepped["b1"]
    h = jnp.maximum(h, 0.0)
    heads = jnp.dot(h.astype(jnp.bfloat16), prepped["wh"],
                    preferred_element_type=jnp.float32) + prepped["bh"]
    mu, std_pre = heads[:, :A], heads[:, A:]
    std = jnp.maximum(_softplus(std_pre), 1e-6)
    normal_sample = mu + std * eps
    log_prob = -0.5 * eps * eps - jnp.log(std) - _HALF_LOG_2PI
    action = jnp.tanh(normal_sample)
    t2 = jnp.tanh(action)
    log_prob = log_prob - jnp.log(1.0 - t2 * t2 + 1e-7)
    return action, jnp.sum(log_prob, axis=-1, keepdims=True)


if __name__ == "__main__":
    state_dim, hidden_dim, action_dim = 16, 32, 4
    batch = 8

    key = jax.random.PRNGKey(0)
    k_x, k_p, k_eps = jax.random.split(key, 3)

    x = jax.random.normal(k_x, (batch, state_dim), jnp.float32)
    params = init_params(k_p, state_dim, hidden_dim, action_dim)
    prepped = prepare_params(params)
    eps = jax.random.normal(k_eps, (batch, action_dim), jnp.float32)

    action, log_prob = policy_forward(x, prepped, eps)
    jax.block_until_ready((action, log_prob))

    assert action.shape == (batch, action_dim)
    assert log_prob.shape == (batch, 1)
    assert bool(jnp.all(jnp.isfinite(action))) and bool(jnp.all(jnp.isfinite(log_prob)))

    ref_action, ref_logp = _reference_forward(x, prepped, eps)
    assert bool(jnp.allclose(action, ref_action, atol=1e-2, rtol=1e-2))
    assert bool(jnp.allclose(log_prob, ref_logp, atol=1e-2, rtol=1e-2))

    print("KERNEL_OK")
</pallas_src>

<mosaic_0001>
module attributes {stable_mosaic.version = 11 : i64} {
  func.func @policy_kernel(%arg0: i32, %arg1: memref<16x16xf32, #tpu.memory_space<vmem>>, %arg2: memref<16x32xbf16, #tpu.memory_space<vmem>>, %arg3: memref<1x32xf32, #tpu.memory_space<vmem>>, %arg4: memref<32x8xbf16, #tpu.memory_space<vmem>>, %arg5: memref<1x8xf32, #tpu.memory_space<vmem>>, %arg6: memref<16x4xf32, #tpu.memory_space<vmem>>, %arg7: memref<16x4xf32, #tpu.memory_space<vmem>>, %arg8: memref<16x1xf32, #tpu.memory_space<vmem>>) attributes {dimension_semantics = [#tpu.dimension_semantics<parallel>], iteration_bounds = array<i64: 1>, scalar_prefetch = 0 : i64, scratch_operands = 0 : i64, tpu.core_type = #tpu.core_type<tc>, window_params = [{transform_indices = @transform_0, window_bounds = array<i64: 16, 16>}, {pipeline_mode = #tpu.pipeline_mode<synchronous>, transform_indices = @transform_1, window_bounds = array<i64: 16, 32>}, {pipeline_mode = #tpu.pipeline_mode<synchronous>, transform_indices = @transform_2, window_bounds = array<i64: 1, 32>}, {pipeline_mode = #tpu.pipeline_mode<synchronous>, transform_indices = @transform_3, window_bounds = array<i64: 32, 8>}, {pipeline_mode = #tpu.pipeline_mode<synchronous>, transform_indices = @transform_4, window_bounds = array<i64: 1, 8>}, {transform_indices = @transform_5, window_bounds = array<i64: 16, 4>}, {transform_indices = @transform_6, window_bounds = array<i64: 16, 4>}, {transform_indices = @transform_7, window_bounds = array<i64: 16, 1>}]} {
    %c0 = arith.constant 0 : index
    %c0_0 = arith.constant 0 : index
    %0 = vector.load %arg1[%c0, %c0_0] : memref<16x16xf32, #tpu.memory_space<vmem>>, vector<16x16xf32>
    %1 = arith.truncf %0 : vector<16x16xf32> to vector<16x16xbf16>
    %c0_1 = arith.constant 0 : index
    %c0_2 = arith.constant 0 : index
    %2 = vector.load %arg2[%c0_1, %c0_2] : memref<16x32xbf16, #tpu.memory_space<vmem>>, vector<16x32xbf16>
    %cst = arith.constant dense<0.000000e+00> : vector<16x32xf32>
    %3 = tpu.matmul %1, %2, %cst {dimension_numbers = #tpu.dot_dimension_numbers<[1], [0], [0], [1], [0, 0, 1, 1], [], []>} : vector<16x16xbf16>, vector<16x32xbf16>, vector<16x32xf32> -> vector<16x32xf32>
    %c0_3 = arith.constant 0 : index
    %c0_4 = arith.constant 0 : index
    %4 = vector.load %arg3[%c0_3, %c0_4] : memref<1x32xf32, #tpu.memory_space<vmem>>, vector<1x32xf32>
    %5 = vector.broadcast %4 : vector<1x32xf32> to vector<16x32xf32>
    %6 = arith.addf %3, %5 : vector<16x32xf32>
    %cst_5 = arith.constant 0.000000e+00 : f32
    %7 = vector.broadcast %cst_5 : f32 to vector<16x32xf32>
    %8 = arith.maximumf %6, %7 : vector<16x32xf32>
    %9 = arith.truncf %8 : vector<16x32xf32> to vector<16x32xbf16>
    %c0_6 = arith.constant 0 : index
    %c0_7 = arith.constant 0 : index
    %10 = vector.load %arg4[%c0_6, %c0_7] : memref<32x8xbf16, #tpu.memory_space<vmem>>, vector<32x8xbf16>
    %cst_8 = arith.constant dense<0.000000e+00> : vector<16x8xf32>
    %11 = tpu.matmul %9, %10, %cst_8 {dimension_numbers = #tpu.dot_dimension_numbers<[1], [0], [0], [1], [0, 0, 1, 1], [], []>} : vector<16x32xbf16>, vector<32x8xbf16>, vector<16x8xf32> -> vector<16x8xf32>
    %c0_9 = arith.constant 0 : index
    %c0_10 = arith.constant 0 : index
    %12 = vector.load %arg5[%c0_9, %c0_10] : memref<1x8xf32, #tpu.memory_space<vmem>>, vector<1x8xf32>
    %13 = vector.broadcast %12 : vector<1x8xf32> to vector<16x8xf32>
    %14 = arith.addf %11, %13 : vector<16x8xf32>
    %15 = vector.extract_strided_slice %14 {offsets = [0, 0], sizes = [16, 4], strides = [1, 1]} : vector<16x8xf32> to vector<16x4xf32>
    %16 = vector.extract_strided_slice %14 {offsets = [0, 4], sizes = [16, 4], strides = [1, 1]} : vector<16x8xf32> to vector<16x4xf32>
    %cst_11 = arith.constant 0.000000e+00 : f32
    %17 = vector.broadcast %cst_11 : f32 to vector<16x4xf32>
    %18 = arith.maximumf %16, %17 : vector<16x4xf32>
    %19 = math.absf %16 : vector<16x4xf32>
    %cst_12 = arith.constant 0.000000e+00 : f32
    %20 = vector.broadcast %cst_12 : f32 to vector<16x4xf32>
    %21 = arith.subf %20, %19 : vector<16x4xf32>
    %22 = math.exp %21 : vector<16x4xf32>
    %23 = math.log1p %22 : vector<16x4xf32>
    %24 = arith.addf %18, %23 : vector<16x4xf32>
    %cst_13 = arith.constant 9.99999997E-7 : f32
    %25 = vector.broadcast %cst_13 : f32 to vector<16x4xf32>
    %26 = arith.maximumf %24, %25 : vector<16x4xf32>
    %c0_14 = arith.constant 0 : index
    %c0_15 = arith.constant 0 : index
    %27 = vector.load %arg6[%c0_14, %c0_15] : memref<16x4xf32, #tpu.memory_space<vmem>>, vector<16x4xf32>
    %28 = arith.mulf %26, %27 : vector<16x4xf32>
    %29 = arith.addf %15, %28 : vector<16x4xf32>
    %cst_16 = arith.constant -5.000000e-01 : f32
    %30 = vector.broadcast %cst_16 : f32 to vector<16x4xf32>
    %31 = arith.mulf %30, %27 : vector<16x4xf32>
    %32 = arith.mulf %31, %27 : vector<16x4xf32>
    %33 = math.log %26 : vector<16x4xf32>
    %34 = arith.subf %32, %33 : vector<16x4xf32>
    %cst_17 = arith.constant 0.918938517 : f32
    %35 = vector.broadcast %cst_17 : f32 to vector<16x4xf32>
    %36 = arith.subf %34, %35 : vector<16x4xf32>
    %37 = math.tanh %29 : vector<16x4xf32>
    %38 = math.tanh %37 : vector<16x4xf32>
    %39 = arith.mulf %38, %38 : vector<16x4xf32>
    %cst_18 = arith.constant 1.000000e+00 : f32
    %40 = vector.broadcast %cst_18 : f32 to vector<16x4xf32>
    %41 = arith.subf %40, %39 : vector<16x4xf32>
    %cst_19 = arith.constant 1.000000e-07 : f32
    %42 = vector.broadcast %cst_19 : f32 to vector<16x4xf32>
    %43 = arith.addf %41, %42 : vector<16x4xf32>
    %44 = math.log %43 : vector<16x4xf32>
    %45 = arith.subf %36, %44 : vector<16x4xf32>
    %c0_20 = arith.constant 0 : index
    %c0_21 = arith.constant 0 : index
    %46 = vector.load %arg7[%c0_20, %c0_21] : memref<16x4xf32, #tpu.memory_space<vmem>>, vector<16x4xf32>
    tpu.vector_store %arg7[%c0_20, %c0_21], %37 {strides = array<i32>} : memref<16x4xf32, #tpu.memory_space<vmem>>, vector<16x4xf32>,
    %cst_22 = arith.constant dense<0.000000e+00> : vector<16xf32>
    %47 = vector.multi_reduction <add>, %45, %cst_22 [1] : vector<16x4xf32> to vector<16xf32>
    %48 = vector.shape_cast %47 : vector<16xf32> to vector<16x1xf32>
    %c0_23 = arith.constant 0 : index
    %c0_24 = arith.constant 0 : index
    %49 = vector.load %arg8[%c0_23, %c0_24] : memref<16x1xf32, #tpu.memory_space<vmem>>, vector<16x1xf32>
    tpu.vector_store %arg8[%c0_23, %c0_24], %48 {strides = array<i32>} : memref<16x1xf32, #tpu.memory_space<vmem>>, vector<16x1xf32>,
    return
  }
  func.func @transform_0(%arg0: i32) -> (i32, i32) {
    %c0_i32 = arith.constant 0 : i32
    %c0_i32_0 = arith.constant 0 : i32
    return %arg0, %c0_i32 : i32, i32
  }
  func.func @transform_1(%arg0: i32) -> (i32, i32) {
    %c0_i32 = arith.constant 0 : i32
    %c0_i32_0 = arith.constant 0 : i32
    %c0_i32_1 = arith.constant 0 : i32
    return %c0_i32, %c0_i32_0 : i32, i32
  }
  func.func @transform_2(%arg0: i32) -> (i32, i32) {
    %c0_i32 = arith.constant 0 : i32
    %c0_i32_0 = arith.constant 0 : i32
    %c0_i32_1 = arith.constant 0 : i32
    return %c0_i32, %c0_i32_0 : i32, i32
  }
  func.func @transform_3(%arg0: i32) -> (i32, i32) {
    %c0_i32 = arith.constant 0 : i32
    %c0_i32_0 = arith.constant 0 : i32
    %c0_i32_1 = arith.constant 0 : i32
    return %c0_i32, %c0_i32_0 : i32, i32
  }
  func.func @transform_4(%arg0: i32) -> (i32, i32) {
    %c0_i32 = arith.constant 0 : i32
    %c0_i32_0 = arith.constant 0 : i32
    %c0_i32_1 = arith.constant 0 : i32
    return %c0_i32, %c0_i32_0 : i32, i32
  }
  func.func @transform_5(%arg0: i32) -> (i32, i32) {
    %c0_i32 = arith.constant 0 : i32
    %c0_i32_0 = arith.constant 0 : i32
    return %arg0, %c0_i32 : i32, i32
  }
  func.func @transform_6(%arg0: i32) -> (i32, i32) {
    %c0_i32 = arith.constant 0 : i32
    %c0_i32_0 = arith.constant 0 : i32
    return %arg0, %c0_i32 : i32, i32
  }
  func.func @transform_7(%arg0: i32) -> (i32, i32) {
    %c0_i32 = arith.constant 0 : i32
    %c0_i32_0 = arith.constant 0 : i32
    return %arg0, %c0_i32 : i32, i32
  }
}

</mosaic_0001>

<llo_original>
// kernel: tpu_custom_call.1
$region0: #{tpu_custom_call.1}
  #allocation0 [shape = 'u32[]', space=smem, size = 0x4, offset = 0x4, fixed_abs, tag = 'smem constant byte address 0x4 - core index']
  #allocation1 [shape = 'u32[72,128]{1,0:T(1,128)}', space=vmem, size = 0x9000, scoped, tag = 'internal scratch']
  %s0 = inlined_call_operand.vmem [shape: f32[16,16], index: 0, kind: input, shape index: {}]
  %s1 = inlined_call_operand.vmem [shape: bf16[16,32], index: 1, kind: input, shape index: {}]
  %s2 = inlined_call_operand.vmem [shape: f32[1,32], index: 2, kind: input, shape index: {}]
  %s3 = inlined_call_operand.vmem [shape: bf16[32,8], index: 3, kind: input, shape index: {}]
  %s4 = inlined_call_operand.vmem [shape: f32[1,8], index: 4, kind: input, shape index: {}]
  %s5 = inlined_call_operand.vmem [shape: f32[16,4], index: 5, kind: input, shape index: {}]
  %s6 = inlined_call_operand.vmem [shape: f32[16,4], index: 6, kind: output, shape index: {0}]
  %s7 = inlined_call_operand.vmem [shape: f32[16,1], index: 7, kind: output, shape index: {1}]
  %8 = xla_tuple %s6, %s7
  %s9 = sld [smem:[#allocation0]]
  $region42: #{tpu_custom_call.1} parent=0
    _
  %s11 = ssub.s32 1, %s9
  %s12 = scalar_select 0, %s11, %s9
  // Predicated region
  $region2: #{tpu_custom_call.1} parent=0 // pred_check
    _
  $region3: #{tpu_custom_call.1} parent=0 // pred_check_branch
    %14 = sbr.rel (0) target = $region5
  $region4: #{tpu_custom_call.1} parent=0 // pred_region
    _
  $region5: #{tpu_custom_call.1} parent=0 // pred_fallthru
    _
  // Predicated region
  $region6: #{tpu_custom_call.1} parent=0 // pred_check
    _
  $region7: #{tpu_custom_call.1} parent=0 // pred_check_branch
    %16 = sbr.rel (0) target = $region9
  $region8: #{tpu_custom_call.1} parent=0 // pred_region
    _
  $region9: #{tpu_custom_call.1} parent=0 // pred_fallthru
    _
  // Predicated region
  $region10: #{tpu_custom_call.1} parent=0 // pred_check
    _
  $region11: #{tpu_custom_call.1} parent=0 // pred_check_branch
    %18 = sbr.rel (0) target = $region13
  $region12: #{tpu_custom_call.1} parent=0 // pred_region
    _
  $region13: #{tpu_custom_call.1} parent=0 // pred_fallthru
    _
  // Predicated region
  $region14: #{tpu_custom_call.1} parent=0 // pred_check
    _
  $region15: #{tpu_custom_call.1} parent=0 // pred_check_branch
    %20 = sbr.rel (0) target = $region17
  $region16: #{tpu_custom_call.1} parent=0 // pred_region
    _
  $region17: #{tpu_custom_call.1} parent=0 // pred_fallthru
    _
  // Predicated region
  $region18: #{tpu_custom_call.1} parent=0 // pred_check
    _
  $region19: #{tpu_custom_call.1} parent=0 // pred_check_branch
    %22 = sbr.rel (0) target = $region21
  $region20: #{tpu_custom_call.1} parent=0 // pred_region
    _
  $region21: #{tpu_custom_call.1} parent=0 // pred_fallthru
    _
  // Predicated region
  $region22: #{tpu_custom_call.1} parent=0 // pred_check
    _
  $region23: #{tpu_custom_call.1} parent=0 // pred_check_branch
    %24 = sbr.rel (0) target = $region25
  $region24: #{tpu_custom_call.1} parent=0 // pred_region
    _
  $region25: #{tpu_custom_call.1} parent=0 // pred_fallthru
    _
  %v26 = vld [vmem:[%s0] sm:$0xff]
  %v27 = vld [vmem:[%s0 + $0x8] sm:$0xff]
  %v28 = vpack.c.bf16 %v27, %v26
  %v29 = vld [vmem:[%s1] sm:$0xf]
  %v30 = vld [vmem:[%s1 + $0x4] sm:$0xf]
  %v31 = vld [vmem:[%s2] sm:$0x1]
  %v33 = vperm.slane %v31, 0
  %v37 = vunpack.c.l.b16 %v29
  %v38 = vunpack.c.l.b16 %v30
  %v39 = vpack.c.b16 %v38, %v37
  %vm41 = vcmask 130048
  %v43 = vsel %vm41, %v28, 0
  %45 = vmatpush.bf16.msra.mxu0 0
  %46 = vmatpush.bf16.msra.mxu0 0
  %47 = vmatpush.bf16.msra.mxu0 0
  %48 = vmatpush.bf16.msra.mxu0 0
  %49 = vmatpush.bf16.msra.mxu0 0
  %50 = vmatpush.bf16.msra.mxu0 0
  %51 = vmatpush.bf16.msra.mxu0 0
  %52 = vmatpush.bf16.msra.mxu0 %v39
  %53 = vmatmul.bf16.gmra.mxu0 %v43
  %v54 = vpop.f32.mrf.mxu0
  %v55 = vadd.f32 %v33, %v54
  %v56 = vpop.f32.mrf.mxu0
  %v57 = vadd.f32 %v33, %v56
  %58 = vdwg.mxu0
  %v59 = vmax.f32 %v55, 0.0
  %v60 = vmax.f32 %v57, 0.0
  %v61 = vpack.c.bf16 %v60, %v59
  %v62 = vld [vmem:[%s3] sm:$0xf]
  %v63 = vld [vmem:[%s3 + $0x4] sm:$0xf]
  %v64 = vld [vmem:[%s3 + $0x8] sm:$0xf]
  %v65 = vld [vmem:[%s3 + $0xc] sm:$0xf]
  %v66 = vld [vmem:[%s4] sm:$0x1]
  %v68 = vperm.slane %v66, 0
  %v74 = vunpack.c.l.b16 %v62
  %v75 = vunpack.c.l.b16 %v63
  %v76 = vunpack.c.l.b16 %v64
  %v77 = vunpack.c.l.b16 %v65
  %v78 = vpack.c.b16 %v75, %v74
  %v79 = vpack.c.b16 %v77, %v76
  %vm82 = vcmask 261120
  %v84 = vsel %vm82, %v61, 0
  %86 = vmatpush.bf16.msra.mxu0 0
  %87 = vmatpush.bf16.msra.mxu0 0
  %88 = vmatpush.bf16.msra.mxu0 0
  %89 = vmatpush.bf16.msra.mxu0 0
  %90 = vmatpush.bf16.msra.mxu0 0
  %91 = vmatpush.bf16.msra.mxu0 0
  %92 = vmatpush.bf16.msra.mxu0 %v79
  %93 = vmatpush.bf16.msra.mxu0 %v78
  %94 = vmatmul.bf16.gmra.mxu0 %v84
  %v95 = vpop.f32.mrf.mxu0
  %v96 = vadd.f32 %v68, %v95
  %v97 = vpop.f32.mrf.mxu0
  %v98 = vadd.f32 %v68, %v97
  %99 = vdwg.mxu0
  %v100 = vmax.f32 %v96, 0.0
  %v101 = vmax.f32 %v98, 0.0
  %v102 = vand.u32 2147483647, %v96
  %v103 = vand.u32 2147483647, %v98
  %v104 = vsub.f32 0.0, %v102
  %v105 = vsub.f32 0.0, %v103
  %v106 = vmul.f32 %v104, 1.442695
  %v107 = vpow.pop %v106
  %v108 = vmul.f32 %v105, 1.442695
  %v109 = vpow.pop %v108
  %v110 = vadd.f32 %v107, 1.0
  %v111 = vlog2.pop %v110
  %v112 = vmul.f32 %v111, 0.6931472
  %v113 = vmul.f32 -0.5, %v107
  %v114 = vadd.f32 %v113, 1.0
  %v115 = vmul.f32 %v114, %v107
  %v116 = vand.u32 2147483647, %v107
  %vm117 = vcmp.lt.f32.partialorder %v116, 0.0004427343
  %v118 = vsel %vm117, %v115, %v112
  %v119 = vadd.f32 %v109, 1.0
  %v120 = vlog2.pop %v119
  %v121 = vmul.f32 %v120, 0.6931472
  %v122 = vmul.f32 -0.5, %v109
  %v123 = vadd.f32 %v122, 1.0
  %v124 = vmul.f32 %v123, %v109
  %v125 = vand.u32 2147483647, %v109
  %vm126 = vcmp.lt.f32.partialorder %v125, 0.0004427343
  %v127 = vsel %vm126, %v124, %v121
  %v128 = vadd.f32 %v100, %v118
  %v129 = vadd.f32 %v101, %v127
  %v130 = vmax.f32 %v128, 1e-06
  %v131 = vmax.f32 %v129, 1e-06
  %v132 = vld [vmem:[%s5] sm:$0xff]
  %v133 = vld [vmem:[%s5 + $0x8] sm:$0xff]
  %136 = vrot.lane.b32.xlu0 %v132, 4
  %v137 = vpop.permute.xlu0 %136
  %138 = vrot.lane.b32.xlu0 %v133, 4
  %v139 = vpop.permute.xlu0 %138
  %v142 = vmul.f32 %v130, %v137
  %v143 = vmul.f32 %v131, %v139
  %146 = vrot.lane.b32.xlu0 %v142, 124
  %v147 = vpop.permute.xlu0 %146
  %148 = vrot.lane.b32.xlu0 %v143, 124
  %v149 = vpop.permute.xlu0 %148
  %v152 = vadd.f32 %v96, %v147
  %v153 = vadd.f32 %v98, %v149
  %v154 = vmul.f32 %v132, -0.5
  %v155 = vmul.f32 %v133, -0.5
  %v156 = vmul.f32 %v154, %v132
  %v157 = vmul.f32 %v155, %v133
  %v158 = vlog2.pop %v130
  %v159 = vmul.f32 %v158, 0.6931472
  %v160 = vlog2.pop %v131
  %v161 = vmul.f32 %v160, 0.6931472
  %164 = vrot.lane.b32.xlu0 %v159, 124
  %v165 = vpop.permute.xlu0 %164
  %166 = vrot.lane.b32.xlu0 %v161, 124
  %v167 = vpop.permute.xlu0 %166
  %v170 = vsub.f32 %v156, %v165
  %v171 = vsub.f32 %v157, %v167
  %v172 = vsub.f32 %v170, 0.9189385
  %v173 = vsub.f32 %v171, 0.9189385
  %v174 = vtanh.pop %v152
  %v175 = vtanh.pop %v153
  %v176 = vtanh.pop %v174
  %v177 = vtanh.pop %v175
  %v178 = vmul.f32 %v176, %v176
  %v179 = vmul.f32 %v177, %v177
  %v180 = vsub.f32 1.0, %v178
  %v181 = vsub.f32 1.0, %v179
  %v182 = vadd.f32 %v180, 1e-07
  %v183 = vadd.f32 %v181, 1e-07
  %v184 = vlog2.pop %v182
  %v185 = vmul.f32 %v184, 0.6931472
  %v186 = vlog2.pop %v183
  %v187 = vmul.f32 %v186, 0.6931472
  %v188 = vsub.f32 %v172, %v185
  %v189 = vsub.f32 %v173, %v187
  %vm190 = vcmask 31744
  %191 = vst.msk [vmem:[%s6] sm:$0xff] %vm190, %v174
  %192 = vst.msk [vmem:[%s6 + $0x8] sm:$0xff] %vm190, %v175
  %v193 = vsel %vm190, %v188, 0.0
  %194 = vadd.xlane.f32.xlu0 %v193
  %v195 = vpop.xlane.xlu0 %194
  %v196 = vsel %vm190, %v189, 0.0
  %197 = vadd.xlane.f32.xlu0 %v196
  %v198 = vpop.xlane.xlu0 %197
  %vm199 = vcmask 7168
  %200 = vst.msk [vmem:[%s7] sm:$0xff] %vm199, %v195
  %201 = vst.msk [vmem:[%s7 + $0x8] sm:$0xff] %vm199, %v198
  // Predicated region
  $region26: #{tpu_custom_call.1} parent=0 // pred_check
    _
  $region27: #{tpu_custom_call.1} parent=0 // pred_check_branch
    %203 = sbr.rel (0) target = $region29
  $region28: #{tpu_custom_call.1} parent=0 // pred_region
    _
  $region29: #{tpu_custom_call.1} parent=0 // pred_fallthru
    _
  // Predicated region
  $region30: #{tpu_custom_call.1} parent=0 // pred_check
    _
  $region31: #{tpu_custom_call.1} parent=0 // pred_check_branch
    %205 = sbr.rel (0) target = $region33
  $region32: #{tpu_custom_call.1} parent=0 // pred_region
    _
  $region33: #{tpu_custom_call.1} parent=0 // pred_fallthru
    _
  // Predicated region
  $region34: #{tpu_custom_call.1} parent=0 // pred_check
    _
  $region35: #{tpu_custom_call.1} parent=0 // pred_check_branch
    %207 = sbr.rel (0) target = $region37
  $region36: #{tpu_custom_call.1} parent=0 // pred_region
    _
  $region37: #{tpu_custom_call.1} parent=0 // pred_fallthru
    _
  // Predicated region
  $region38: #{tpu_custom_call.1} parent=0 // pred_check
    _
  $region39: #{tpu_custom_call.1} parent=0 // pred_check_branch
    %209 = sbr.rel (0) target = $region41
  $region40: #{tpu_custom_call.1} parent=0 // pred_region
    _
  $region41: #{tpu_custom_call.1} parent=0 // pred_fallthru
    _

</llo_original>
